<compile_context>
chip_gen: v6e
topology: v6e:2x2x1
jax: 0.10.0
libtpu: 0.0.40
codegen_flags: <defaults>
</compile_context>

<pallas_src>
import jax
import jax.numpy as jnp
from jax.experimental import pallas as pl
from jax.experimental.pallas import tpu as pltpu


_VMEM_LIMIT_BYTES = 48 * 1024 * 1024   # explicit; fits v7x (64 MiB) with headroom
_BLOCK_BUDGET_BYTES = 24 * 1024 * 1024  # live double-buffered blocks stay under this


def _choose_channel_tile(C, HW, itemsize, budget_bytes=_BLOCK_BUDGET_BYTES):
    """Largest channel tile TC (dividing C) whose double-buffered in+out blocks
    fit the budget.  Prefers multiples of 8 (sublane alignment)."""
    # styling kernel: x-in block + out block, each double-buffered -> ~4 live blocks
    max_tc = max(1, budget_bytes // (4 * HW * itemsize))
    if C <= max_tc:
        return C
    tc = (max_tc // 8) * 8
    while tc >= 8 and C % tc != 0:
        tc -= 8
    if tc >= 8 and C % tc == 0:
        return tc
    return C  # awkward C: fall back to whole-channel block


def _stats_kernel(x_ref, mean_ref, std_ref):
    # x_ref: (1, TC, HW)  -> mean_ref, std_ref: (1, TC, 1)
    x = x_ref[...].astype(jnp.float32)
    n = x.shape[-1]
    denom = max(n - 1, 1)  # unbiased variance; guard HW == 1
    mean = jnp.mean(x, axis=-1, keepdims=True)
    xc = x - mean
    var = jnp.sum(xc * xc, axis=-1, keepdims=True) * (1.0 / denom)
    mean_ref[...] = mean.astype(mean_ref.dtype)
    std_ref[...] = jnp.sqrt(var + 1e-5).astype(std_ref.dtype)


def _style_kernel(x_ref, scale_ref, shift_ref, o_ref):
    # x_ref: (1, TC, HW); scale_ref/shift_ref: (1, TC, 1)
    x = x_ref[...].astype(jnp.float32)
    o_ref[...] = (x * scale_ref[...] + shift_ref[...]).astype(o_ref.dtype)


def _compute_stats(x_flat, tc):
    B, C, HW = x_flat.shape
    mean, std = pl.pallas_call(
        _stats_kernel,
        out_shape=(
            jax.ShapeDtypeStruct((B, C, 1), jnp.float32),
            jax.ShapeDtypeStruct((B, C, 1), jnp.float32),
        ),
        grid=(B, C // tc),
        in_specs=[pl.BlockSpec((1, tc, HW), lambda i, c: (i, c, 0))],
        out_specs=(
            pl.BlockSpec((1, tc, 1), lambda i, c: (i, c, 0)),
            pl.BlockSpec((1, tc, 1), lambda i, c: (i, c, 0)),
        ),
        compiler_params=pltpu.CompilerParams(
            dimension_semantics=("parallel", "parallel"),
            vmem_limit_bytes=_VMEM_LIMIT_BYTES,
        ),
    )(x_flat)
    return mean, std


def _apply_affine(x_flat, scale, shift, tc):
    B, C, HW = x_flat.shape
    return pl.pallas_call(
        _style_kernel,
        out_shape=jax.ShapeDtypeStruct((B, C, HW), x_flat.dtype),
        grid=(B, C // tc),
        in_specs=[
            pl.BlockSpec((1, tc, HW), lambda i, c: (i, c, 0)),
            pl.BlockSpec((1, tc, 1), lambda i, c: (i, c, 0)),
            pl.BlockSpec((1, tc, 1), lambda i, c: (i, c, 0)),
        ],
        out_specs=pl.BlockSpec((1, tc, HW), lambda i, c: (i, c, 0)),
        compiler_params=pltpu.CompilerParams(
            dimension_semantics=("parallel", "parallel"),
            vmem_limit_bytes=_VMEM_LIMIT_BYTES,
        ),
    )(x_flat, scale, shift)


def _crossnorm_core(x, mean_p, std_p, mean, std, tc):
    """Fold donor/own stats into a per-(B,C) affine and run the styling pass."""
    scale = std_p / std                      # tiny (B, C, 1) math in glue
    shift = mean_p - mean * scale
    B, C, H, W = x.shape
    out = _apply_affine(x.reshape(B, C, H * W), scale, shift, tc)
    return out.reshape(B, C, H, W)


def crossnorm_2instance(x, perm):
    """x: [B, C, H, W], perm: [B] int32 (batch permutation)."""
    B, C, H, W = x.shape
    HW = H * W
    tc = _choose_channel_tile(C, HW, jnp.dtype(x.dtype).itemsize)
    mean, std = _compute_stats(x.reshape(B, C, HW), tc)
    mean_p = jnp.take(mean, perm, axis=0)    # tiny gathers on (B, C, 1)
    std_p = jnp.take(std, perm, axis=0)
    return _crossnorm_core(x, mean_p, std_p, mean, std, tc)


def crossnorm_1instance(x, perm_c):
    """x: [B, C, H, W], perm_c: [C] int32 (channel permutation). No full-tensor
    gather: only the tiny per-(B,C) stats are permuted."""
    B, C, H, W = x.shape
    HW = H * W
    tc = _choose_channel_tile(C, HW, jnp.dtype(x.dtype).itemsize)
    mean, std = _compute_stats(x.reshape(B, C, HW), tc)
    mean_p = jnp.take(mean, perm_c, axis=1)
    std_p = jnp.take(std, perm_c, axis=1)
    return _crossnorm_core(x, mean_p, std_p, mean, std, tc)


class CrossNormPallas:
    """JAX/Pallas port of CrossNorm ('1-instance' and '2-instance' modes).
    Randomness is driven by an explicit PRNG key; jit-safe (no host sync)."""

    def __init__(self, mode="2-instance", p=0.5, crop_size=None):
        assert mode in ["1-instance", "2-instance", "crop"], f"Invalid mode: {mode}"
        self.mode = mode
        self.p = p
        self.crop_size = crop_size
        self.training = True

    def __call__(self, x, key):
        if not self.training:
            return x
        k_gate, k_perm = jax.random.split(key)
        gate = jax.random.uniform(k_gate, ())   # traced; gated via lax.cond below
        B, C, H, W = x.shape

        if self.mode == "2-instance":
            if B <= 1:
                return x
            perm = jax.random.permutation(k_perm, B).astype(jnp.int32)
            apply_fn = lambda xx: crossnorm_2instance(xx, perm)
        elif self.mode == "1-instance":
            perm_c = jax.random.permutation(k_perm, C).astype(jnp.int32)
            apply_fn = lambda xx: crossnorm_1instance(xx, perm_c)
        else:
            # TODO(synk): 'crop' mode (random spatial crop re-styling) not ported.
            return x

        # torch: rand() > p -> skip; so apply when gate <= p.  No device->host sync.
        return jax.lax.cond(gate <= self.p, apply_fn, lambda xx: xx, x)


# ----------------------------- pure-JAX references ---------------------------

def _reference_2instance(x, perm):
    mean = jnp.mean(x, axis=(2, 3), keepdims=True)
    var = jnp.var(x, axis=(2, 3), keepdims=True, ddof=1)
    std = jnp.sqrt(var + 1e-5)
    return ((x - mean) / std) * std[perm] + mean[perm]


def _reference_1instance(x, perm_c):
    mean = jnp.mean(x, axis=(2, 3), keepdims=True)
    var = jnp.var(x, axis=(2, 3), keepdims=True, ddof=1)
    std = jnp.sqrt(var + 1e-5)
    return ((x - mean) / std) * std[:, perm_c] + mean[:, perm_c]


if __name__ == "__main__":
    key = jax.random.PRNGKey(0)
    k_x, k_perm = jax.random.split(key)

    B, C, H, W = 2, 4, 16, 16
    x = jax.random.normal(k_x, (B, C, H, W), dtype=jnp.float32) * 2.0 + 0.5

    # --- 2-instance mode against reference ---
    perm = jax.random.permutation(k_perm, B).astype(jnp.int32)
    out = jax.block_until_ready(crossnorm_2instance(x, perm))
    ref = _reference_2instance(x, perm)
    assert out.shape == x.shape and out.dtype == x.dtype
    assert float(jnp.max(jnp.abs(out - ref))) < 1e-4, "2-instance mismatch vs reference"

    # --- 1-instance mode against reference ---
    perm_c = jax.random.permutation(jax.random.PRNGKey(2), C).astype(jnp.int32)
    out1 = jax.block_until_ready(crossnorm_1instance(x, perm_c))
    ref1 = _reference_1instance(x, perm_c)
    assert float(jnp.max(jnp.abs(out1 - ref1))) < 1e-4, "1-instance mismatch vs reference"

    # --- module wrapper, jitted (p=1.0 so it always applies) ---
    mod = CrossNormPallas(mode="2-instance", p=1.0)
    out2 = jax.block_until_ready(jax.jit(mod.__call__)(x, jax.random.PRNGKey(1)))
    assert out2.shape == x.shape and out2.dtype == x.dtype

    print("KERNEL_OK")
</pallas_src>

<mosaic_0001>
module attributes {stable_mosaic.version = 11 : i64} {
  func.func @_stats_kernel(%arg0: i32, %arg1: i32, %arg2: memref<1x4x256xf32, #tpu.memory_space<vmem>>, %arg3: memref<1x4x1xf32, #tpu.memory_space<vmem>>, %arg4: memref<1x4x1xf32, #tpu.memory_space<vmem>>) attributes {dimension_semantics = [#tpu.dimension_semantics<parallel>, #tpu.dimension_semantics<parallel>], iteration_bounds = array<i64: 2, 1>, scalar_prefetch = 0 : i64, scratch_operands = 0 : i64, tpu.core_type = #tpu.core_type<tc>, window_params = [{transform_indices = @transform_0, window_bounds = array<i64: 1, 4, 256>}, {transform_indices = @transform_1, window_bounds = array<i64: 1, 4, 1>}, {transform_indices = @transform_2, window_bounds = array<i64: 1, 4, 1>}]} {
    %c0 = arith.constant 0 : index
    %c0_0 = arith.constant 0 : index
    %c0_1 = arith.constant 0 : index
    %0 = vector.load %arg2[%c0, %c0_0, %c0_1] : memref<1x4x256xf32, #tpu.memory_space<vmem>>, vector<1x4x256xf32>
    %cst = arith.constant dense<0.000000e+00> : vector<1x4xf32>
    %1 = vector.multi_reduction <add>, %0, %cst [2] : vector<1x4x256xf32> to vector<1x4xf32>
    %2 = vector.shape_cast %1 : vector<1x4xf32> to vector<1x4x1xf32>
    %cst_2 = arith.constant 2.560000e+02 : f32
    %3 = vector.broadcast %cst_2 : f32 to vector<1x4x1xf32>
    %4 = arith.divf %2, %3 : vector<1x4x1xf32>
    %5 = vector.broadcast %4 : vector<1x4x1xf32> to vector<1x4x256xf32>
    %6 = arith.subf %0, %5 : vector<1x4x256xf32>
    %7 = arith.mulf %6, %6 : vector<1x4x256xf32>
    %cst_3 = arith.constant dense<0.000000e+00> : vector<1x4xf32>
    %8 = vector.multi_reduction <add>, %7, %cst_3 [2] : vector<1x4x256xf32> to vector<1x4xf32>
    %9 = vector.shape_cast %8 : vector<1x4xf32> to vector<1x4x1xf32>
    %cst_4 = arith.constant 0.00392156886 : f32
    %10 = vector.broadcast %cst_4 : f32 to vector<1x4x1xf32>
    %11 = arith.mulf %9, %10 : vector<1x4x1xf32>
    %c0_5 = arith.constant 0 : index
    %c0_6 = arith.constant 0 : index
    %c0_7 = arith.constant 0 : index
    %12 = vector.load %arg3[%c0_5, %c0_6, %c0_7] : memref<1x4x1xf32, #tpu.memory_space<vmem>>, vector<1x4x1xf32>
    tpu.vector_store %arg3[%c0_5, %c0_6, %c0_7], %4 {strides = array<i32>} : memref<1x4x1xf32, #tpu.memory_space<vmem>>, vector<1x4x1xf32>,
    %cst_8 = arith.constant 9.99999974E-6 : f32
    %13 = vector.broadcast %cst_8 : f32 to vector<1x4x1xf32>
    %14 = arith.addf %11, %13 : vector<1x4x1xf32>
    %15 = math.sqrt %14 : vector<1x4x1xf32>
    %c0_9 = arith.constant 0 : index
    %c0_10 = arith.constant 0 : index
    %c0_11 = arith.constant 0 : index
    %16 = vector.load %arg4[%c0_9, %c0_10, %c0_11] : memref<1x4x1xf32, #tpu.memory_space<vmem>>, vector<1x4x1xf32>
    tpu.vector_store %arg4[%c0_9, %c0_10, %c0_11], %15 {strides = array<i32>} : memref<1x4x1xf32, #tpu.memory_space<vmem>>, vector<1x4x1xf32>,
    return
  }
  func.func @transform_0(%arg0: i32, %arg1: i32) -> (i32, i32, i32) {
    %c0_i32 = arith.constant 0 : i32
    %c0_i32_0 = arith.constant 0 : i32
    return %arg0, %arg1, %c0_i32 : i32, i32, i32
  }
  func.func @transform_1(%arg0: i32, %arg1: i32) -> (i32, i32, i32) {
    %c0_i32 = arith.constant 0 : i32
    %c0_i32_0 = arith.constant 0 : i32
    return %arg0, %arg1, %c0_i32 : i32, i32, i32
  }
  func.func @transform_2(%arg0: i32, %arg1: i32) -> (i32, i32, i32) {
    %c0_i32 = arith.constant 0 : i32
    %c0_i32_0 = arith.constant 0 : i32
    return %arg0, %arg1, %c0_i32 : i32, i32, i32
  }
}

</mosaic_0001>

<llo_original>
// kernel: tpu_custom_call.1
$region0: #{tpu_custom_call.1}
  #allocation0 [shape = 'u32[]', space=smem, size = 0x4, offset = 0x4, fixed_abs, tag = 'smem constant byte address 0x4 - core index']
  #allocation1 [shape = 'u32[144,128]{1,0:T(1,128)}', space=vmem, size = 0x12000, scoped, tag = 'internal scratch']
  %s0 = inlined_call_operand.hbm [shape: f32[2,4,256], index: 0, kind: input, shape index: {}]
  %s1 = inlined_call_operand.vmem [shape: f32[2,4,1], index: 1, kind: output, shape index: {0}]
  %s2 = inlined_call_operand.vmem [shape: f32[2,4,1], index: 2, kind: output, shape index: {1}]
  %3 = xla_tuple %s1, %s2
  %s4 = sld [smem:[#allocation0]]
  $region49: #{tpu_custom_call.1} parent=0
    _
  %s6 = ssub.s32 1, %s4
  %s7 = scalar_select 0, %s6, %s4
  $region1: #{tpu_custom_call.1} parent=0
    #allocation2 [shape = 'u8[8192]{0}', space=vmem, size = 0x2000, scoped, tag = 'input window, operand 0']
    #allocation3 [shape = 's32[2]{0}', space=sflag, size = 0x8, scoped, tag = 'scoped memory for tpu_custom_call.1']
    %8 = vsyncpa [#allocation3], 0
    %s9 = scalar_lea.sflag [#allocation3], 1
    %10 = vsyncpa %s9, 0
    loop: start=0, step=1, limit=4
    $region2: #{tpu_custom_call.1} parent=1 // loop_pre_header
      _
    $region3: #{tpu_custom_call.1} parent=1 // loop_header
      %s12 = sphi 0, %s16
      %p13 = scmp.ge.s32.totalorder %s12, 4
      %s19 = sphi 0, %s31
      %s20 = sphi 0, %s27
      %s21 = sphi 0, %s19
      %s22 = sphi 0, %s20
      %s23 = sphi 0, %s21
      %s24 = sphi 0, %s22
      %s36 = sphi 0, %s38
      %s39 = sphi 0, %s36
      %s40 = sphi 0, %s39
      %s56 = sphi 0, %s40
      %s64 = sphi 0, %s66
      %s67 = sphi 0, %s64
      %s68 = sphi 0, %s67
      %s84 = sphi 0, %s68
      %s92 = sphi 0, %s94
      %s95 = sphi 0, %s92
      %s96 = sphi 0, %s95
      %s112 = sphi 0, %s96
    $region4: #{tpu_custom_call.1} parent=1 // loop_header_branch
      %15 = sbr.rel (%p13) target = $region8
    $region5: #{tpu_custom_call.1} parent=1 // loop_body
      %s17 = ssub.s32 %s12, 1
      %s18 = ssub.s32 %s12, 2
      %s25 = sadd.s32 1, %s20
      %p26 = scmp.ge.s32.totalorder %s25, 1
      %s27 = scalar_select %p26, 0, %s25
      %s28 = sadd.s32 1, %s19
      %s29 = scalar_select %p26, %s28, %s19
      %p30 = scmp.ge.s32.totalorder %s29, 2
      %s31 = scalar_select %p30, 0, %s29
      %s32 = ssub.s32 %s19, %s31
      %s33 = ssub.s32 %s20, %s27
      %s34 = sor.u32 %s32, %s33
      %p35 = scmp.eq.s32.totalorder %s34, 0
      %s37 = sadd.s32 %s36, 1
      %s38 = scalar_select %p35, %s36, %s37
      %p41 = pneg %p35
      %p42 = scmp.eq.s32.totalorder %s12, 1
      %p43 = por %p41, %p42
      %p44 = scmp.ne.s32.totalorder %s36, %s39
      %p45 = scmp.eq.s32.totalorder %s12, 0
      %p46 = por %p44, %p45
      %p47 = scmp.ne.s32.totalorder %s36, %s39
      %p48 = scmp.eq.s32.totalorder %s17, 1
      %p49 = por %p47, %p48
      %p50 = scmp.ne.s32.totalorder %s39, %s40
      %p51 = scmp.eq.s32.totalorder %s17, 0
      %p52 = por %p50, %p51
      %p53 = scmp.ne.s32.totalorder %s39, %s40
      %p54 = scmp.eq.s32.totalorder %s18, 1
      %p55 = por %p53, %p54
      %p57 = scmp.ne.s32.totalorder %s40, %s56
      %p58 = scmp.eq.s32.totalorder %s18, 0
      %p59 = por %p57, %p58
      %s60 = ssub.s32 %s19, %s31
      %s61 = ssub.s32 %s20, %s27
      %s62 = sor.u32 %s60, %s61
      %p63 = scmp.eq.s32.totalorder %s62, 0
      %s65 = sadd.s32 %s64, 1
      %s66 = scalar_select %p63, %s64, %s65
      %p69 = pneg %p63
      %p70 = scmp.eq.s32.totalorder %s12, 1
      %p71 = por %p69, %p70
      %p72 = scmp.ne.s32.totalorder %s64, %s67
      %p73 = scmp.eq.s32.totalorder %s12, 0
      %p74 = por %p72, %p73
      %p75 = scmp.ne.s32.totalorder %s64, %s67
      %p76 = scmp.eq.s32.totalorder %s17, 1
      %p77 = por %p75, %p76
      %p78 = scmp.ne.s32.totalorder %s67, %s68
      %p79 = scmp.eq.s32.totalorder %s17, 0
      %p80 = por %p78, %p79
      %p81 = scmp.ne.s32.totalorder %s67, %s68
      %p82 = scmp.eq.s32.totalorder %s18, 1
      %p83 = por %p81, %p82
      %p85 = scmp.ne.s32.totalorder %s68, %s84
      %p86 = scmp.eq.s32.totalorder %s18, 0
      %p87 = por %p85, %p86
      %s88 = ssub.s32 %s19, %s31
      %s89 = ssub.s32 %s20, %s27
      %s90 = sor.u32 %s88, %s89
      %p91 = scmp.eq.s32.totalorder %s90, 0
      %s93 = sadd.s32 %s92, 1
      %s94 = scalar_select %p91, %s92, %s93
      %p97 = pneg %p91
      %p98 = scmp.eq.s32.totalorder %s12, 1
      %p99 = por %p97, %p98
      %p100 = scmp.ne.s32.totalorder %s92, %s95
      %p101 = scmp.eq.s32.totalorder %s12, 0
      %p102 = por %p100, %p101
      %p103 = scmp.ne.s32.totalorder %s92, %s95
      %p104 = scmp.eq.s32.totalorder %s17, 1
      %p105 = por %p103, %p104
      %p106 = scmp.ne.s32.totalorder %s95, %s96
      %p107 = scmp.eq.s32.totalorder %s17, 0
      %p108 = por %p106, %p107
      %p109 = scmp.ne.s32.totalorder %s95, %s96
      %p110 = scmp.eq.s32.totalorder %s18, 1
      %p111 = por %p109, %p110
      %p113 = scmp.ne.s32.totalorder %s96, %s112
      %p114 = scmp.eq.s32.totalorder %s18, 0
      %p115 = por %p113, %p114
      %p116 = scmp.le.s32.totalorder 1, %s12
      %p117 = scmp.lt.s32.totalorder %s12, 3
      %p118 = pnand %p116, %p117
      %p119 = pneg %p118
      // Predicated region
      $region9: #{tpu_custom_call.1} parent=5 // pred_check
        _
      $region10: #{tpu_custom_call.1} parent=5 // pred_check_branch
        %121 = sbr.rel (%p118) target = $region12
      $region11: #{tpu_custom_call.1} parent=5 // pred_region
        %s122 = ssub.s32 %s12, 1
      $region12: #{tpu_custom_call.1} parent=5 // pred_fallthru
        _
      %p123 = scmp.lt.s32.totalorder %s12, 2
      // Predicated region
      $region13: #{tpu_custom_call.1} parent=5 // pred_check
        %p124 = pneg %p123
      $region14: #{tpu_custom_call.1} parent=5 // pred_check_branch
        %126 = sbr.rel (%p124) target = $region16
      $region15: #{tpu_custom_call.1} parent=5 // pred_region
        // Predicated region
        $region17: #{tpu_custom_call.1} parent=15 // pred_check
          %p127 = pneg %p46
        $region18: #{tpu_custom_call.1} parent=15 // pred_check_branch
          %129 = sbr.rel (%p127) target = $region20
        $region19: #{tpu_custom_call.1} parent=15 // pred_region
          %s130 = sand.u32 %s36, 1
          %s131 = scalar_lea.sflag [#allocation3], %s130
          %s132 = sand.u32 %s36, 1
          %s133 = smul.addr %s132, 8
          %s134 = scalar_lea.vmem [#allocation2], %s133
          %s136 = ssub.s32 128, 128
          %137 = vsyncadd %s131, %s136
          %s138 = smul.addr %s20, 2
          %s139 = smul.addr %s19, 2
          %s140 = sadd.s32 %s138, %s139
          %s141 = smul.addr %s140, 64
          %s142 = scalar_lea.hbm %s0, %s141
          %s144 = sshll.u32 %s134, 4
          %s145 = int_to_ptr.vmem [resolvable:$true] %s144
          %147 = dma.hbm_to_vmem [thread:$0]  %s142, 128, %s145, %s131
        $region20: #{tpu_custom_call.1} parent=15 // pred_fallthru
          _
      $region16: #{tpu_custom_call.1} parent=5 // pred_fallthru
        _
      %p148 = scmp.le.s32.totalorder 1, %s12
      %p149 = scmp.lt.s32.totalorder %s12, 3
      %p150 = pnand %p148, %p149
      %p151 = pneg %p150
      // Predicated region
      $region21: #{tpu_custom_call.1} parent=5 // pred_check
        _
      $region22: #{tpu_custom_call.1} parent=5 // pred_check_branch
        %153 = sbr.rel (%p150) target = $region24
      $region23: #{tpu_custom_call.1} parent=5 // pred_region
        %s154 = ssub.s32 %s12, 1
        %s155 = sand.u32 %s39, 1
        %s156 = scalar_lea.sflag [#allocation3], %s155
        %s157 = sand.u32 %s39, 1
        %s158 = smul.addr %s157, 8
        %s159 = scalar_lea.vmem [#allocation2], %s158
        // Predicated region
        $region25: #{tpu_custom_call.1} parent=23 // pred_check
          %p160 = pneg %p52
        $region26: #{tpu_custom_call.1} parent=23 // pred_check_branch
          %162 = sbr.rel (%p160) target = $region28
        $region27: #{tpu_custom_call.1} parent=23 // pred_region
          %163 = dma.done %s156, 128
        $region28: #{tpu_custom_call.1} parent=23 // pred_fallthru
          _
        %s164 = sand.u32 %s39, 1
        %s165 = scalar_lea.sflag [#allocation3], %s164
        %s166 = sand.u32 %s39, 1
        %s167 = smul.addr %s166, 8
        %s168 = scalar_lea.vmem [#allocation2], %s167
        %p169 = pneg %p52
        %p170 = pneg %p49
        %p171 = pneg %p80
        %p172 = pneg %p77
        %p173 = scmp.lt.s32.totalorder %s21, 1
        %s174 = scalar_select %p173, %s21, 1
        %p175 = scmp.lt.s32.totalorder %s22, 0
        %s176 = scalar_select %p175, %s22, 0
        %s177 = sadd.s32 %s176, %s174
        %s178 = smul.addr %s177, 4
        %s179 = scalar_lea.vmem %s1, %s178
        %p180 = pneg %p108
        %p181 = pneg %p105
        %p182 = scmp.lt.s32.totalorder %s21, 1
        %s183 = scalar_select %p182, %s21, 1
        %p184 = scmp.lt.s32.totalorder %s22, 0
        %s185 = scalar_select %p184, %s22, 0
        %s186 = sadd.s32 %s185, %s183
        %s187 = smul.addr %s186, 4
        %s188 = scalar_lea.vmem %s2, %s187
        %p189 = scmp.lt.s32.totalorder %s21, 1
        %s190 = scalar_select %p189, %s21, 1
        %p191 = scmp.lt.s32.totalorder %s22, 0
        %s192 = scalar_select %p191, %s22, 0
        %s193 = sadd.s32 %s192, %s190
        %s194 = smul.addr %s193, 4
        %s195 = scalar_lea.vmem %s1, %s194
        %p196 = scmp.lt.s32.totalorder %s21, 1
        %s197 = scalar_select %p196, %s21, 1
        %p198 = scmp.lt.s32.totalorder %s22, 0
        %s199 = scalar_select %p198, %s22, 0
        %s200 = sadd.s32 %s199, %s197
        %s201 = smul.addr %s200, 4
        %s202 = scalar_lea.vmem %s2, %s201
        %v203 = vld [vmem:[%s159] sm:$0xff]
        %v205 = vcombine.high %v203, %v203
        %vm207 = vcmask 1043456
        %v208 = vsel %vm207, %v203, 0.0
        %v209 = vsel %vm207, %v205, 0.0
        %v210 = vadd.f32 %v208, %v209
        %211 = vadd.xlane.f32.xlu0 %v210
        %v212 = vpop.xlane.xlu0 %211
        %v213 = vrcp.pop 256.0
        %v214 = vmul.f32 %v212, %v213
        %v217 = vunpack.c.l.s4 839922192
        %v218 = vunpack.c.0.s8 %v217
        %v219 = vlaneseq
        %v220 = vshrl.u32 %v219, 7
        %v221 = vsub.s32 %v218, %v220
        %v222 = vrot.slane %v214, %v221
        %v224 = vsub.f32 %v203, %v222
        %v225 = vmul.f32 %v224, %v224
        %v227 = vcombine.high %v225, %v225
        %v229 = vsel %vm207, %v225, 0.0
        %v230 = vsel %vm207, %v227, 0.0
        %v231 = vadd.f32 %v229, %v230
        %232 = vadd.xlane.f32.xlu0 %v231
        %v233 = vpop.xlane.xlu0 %232
        %v234 = vmul.f32 %v233, 0.003921569
        %vm235 = vcmask 3072
        %236 = vst.msk [vmem:[%s195] sm:$0xf] %vm235, %v214
        %v237 = vadd.f32 %v234, 1e-05
        %v238 = vrsqrt.pop %v237
        %v239 = vmul.f32 %v237, %v238
        %vm240 = vcmp.eq.f32.partialorder %v237, inf
        %v241 = vsel %vm240, %v237, %v239
        %vm242 = vcmp.eq.f32.partialorder %v237, 0.0
        %v243 = vand.u32 %v237, 2147483648
        %v244 = vsel %vm242, %v243, %v241
        %245 = vst.msk [vmem:[%s202] sm:$0xf] %vm235, %v244
        %p246 = scmp.lt.s32.totalorder %s21, 1
        %s247 = scalar_select %p246, %s21, 1
        %p248 = scmp.lt.s32.totalorder %s22, 0
        %s249 = scalar_select %p248, %s22, 0
        %s250 = sadd.s32 %s249, %s247
        %s251 = smul.addr %s250, 4
        %s252 = scalar_lea.vmem %s1, %s251
        %p253 = scmp.lt.s32.totalorder %s21, 1
        %s254 = scalar_select %p253, %s21, 1
        %p255 = scmp.lt.s32.totalorder %s22, 0
        %s256 = scalar_select %p255, %s22, 0
        %s257 = sadd.s32 %s256, %s254
        %s258 = smul.addr %s257, 4
        %s259 = scalar_lea.vmem %s2, %s258
        // Predicated region
        $region29: #{tpu_custom_call.1} parent=23 // pred_check
          %p260 = pneg %p77
        $region30: #{tpu_custom_call.1} parent=23 // pred_check_branch
          %262 = sbr.rel (%p260) target = $region32
        $region31: #{tpu_custom_call.1} parent=23 // pred_region
          _
        $region32: #{tpu_custom_call.1} parent=23 // pred_fallthru
          _
        // Predicated region
        $region33: #{tpu_custom_call.1} parent=23 // pred_check
          %p263 = pneg %p105
        $region34: #{tpu_custom_call.1} parent=23 // pred_check_branch
          %265 = sbr.rel (%p263) target = $region36
        $region35: #{tpu_custom_call.1} parent=23 // pred_region
          _
        $region36: #{tpu_custom_call.1} parent=23 // pred_fallthru
          _
      $region24: #{tpu_custom_call.1} parent=5 // pred_fallthru
        _
      %p266 = scmp.le.s32.totalorder 2, %s12
      // Predicated region
      $region37: #{tpu_custom_call.1} parent=5 // pred_check
        %p267 = pneg %p266
      $region38: #{tpu_custom_call.1} parent=5 // pred_check_branch
        %269 = sbr.rel (%p267) target = $region40
      $region39: #{tpu_custom_call.1} parent=5 // pred_region
        %s270 = ssub.s32 %s12, 2
        // Predicated region
        $region41: #{tpu_custom_call.1} parent=39 // pred_check
          %p271 = pneg %p83
        $region42: #{tpu_custom_call.1} parent=39 // pred_check_branch
          %273 = sbr.rel (%p271) target = $region44
        $region43: #{tpu_custom_call.1} parent=39 // pred_region
          %p274 = scmp.lt.s32.totalorder %s23, 1
          %s275 = scalar_select %p274, %s23, 1
          %p276 = scmp.lt.s32.totalorder %s24, 0
          %s277 = scalar_select %p276, %s24, 0
          %s278 = sadd.s32 %s277, %s275
          %s279 = smul.addr %s278, 4
          %s280 = scalar_lea.vmem %s1, %s279
        $region44: #{tpu_custom_call.1} parent=39 // pred_fallthru
          _
        // Predicated region
        $region45: #{tpu_custom_call.1} parent=39 // pred_check
          %p281 = pneg %p111
        $region46: #{tpu_custom_call.1} parent=39 // pred_check_branch
          %283 = sbr.rel (%p281) target = $region48
        $region47: #{tpu_custom_call.1} parent=39 // pred_region
          %p284 = scmp.lt.s32.totalorder %s23, 1
          %s285 = scalar_select %p284, %s23, 1
          %p286 = scmp.lt.s32.totalorder %s24, 0
          %s287 = scalar_select %p286, %s24, 0
          %s288 = sadd.s32 %s287, %s285
          %s289 = smul.addr %s288, 4
          %s290 = scalar_lea.vmem %s2, %s289
        $region48: #{tpu_custom_call.1} parent=39 // pred_fallthru
          _
      $region40: #{tpu_custom_call.1} parent=5 // pred_fallthru
        _
    $region6: #{tpu_custom_call.1} parent=1 // loop_footer
      %s16 = sadd.s32 1, %s12
    $region7: #{tpu_custom_call.1} parent=1 // loop_footer_branch
      %11 = sbr.rel target = $region3
    $region8: #{tpu_custom_call.1} parent=1 // loop_exit
      _
    %291 = vsyncpa [#allocation3], 1
    %s292 = scalar_lea.sflag [#allocation3], 1
    %293 = vsyncpa %s292, 1

</llo_original>
